<compile_context>
chip_gen: v5e
topology: v5e:2x2
jax: 0.10.0
libtpu: 0.0.40
codegen_flags: <defaults>
</compile_context>

<pallas_src>
import math

import jax
import jax.numpy as jnp
from jax.experimental import pallas as pl
from jax.experimental.pallas import tpu as pltpu


def _round_up(x, m):
    return ((x + m - 1) // m) * m


def _pad2(a, shape, dtype):
    """Zero-pad 2-D `a` up to `shape` and cast to `dtype` (no-op if already there)."""
    a = a.astype(dtype)
    if tuple(a.shape) == tuple(shape):
        return a
    return jnp.zeros(shape, dtype).at[: a.shape[0], : a.shape[1]].set(a)


def _vmem_capacity_bytes():
    """Per-core VMEM capacity; conservative fallback if the query is unavailable."""
    try:
        cap = getattr(pltpu.get_tpu_info(), "vmem_capacity_bytes", None)
        if cap:
            return int(cap)
    except Exception:
        pass
    return 64 * 1024 * 1024  # v7x per-TensorCore VMEM (smallest of v5e/v6e/v7x)


def _make_kernel(D, D_pad, w_dtype, needs_pad):
    pad_start = (D // 128) * 128  # lane-aligned start of the partially-valid tile

    def kernel(x_ref, w1_ref, b1_ref, w2_ref, b2_ref, o_ref, *scratch):
        w1 = w1_ref[...]          # resident in VMEM (single copy, no re-fetch)
        w2 = w2_ref[...]
        if needs_pad:
            (xpad_ref,) = scratch
            nrow = xpad_ref.shape[0]
            # Zero the last (partially valid) 128-lane tile, then overwrite the
            # valid columns.  Both stores start lane-aligned, and the
            # contraction padding is exactly zero on every grid step (safe with
            # megacore-parallel grids: no reliance on a "step 0" init).
            xpad_ref[:, pad_start:] = jnp.zeros(
                (nrow, D_pad - pad_start), xpad_ref.dtype)
            xpad_ref[:, :D] = x_ref[...]
            x = xpad_ref[...]
        else:
            x = x_ref[...]
        # MXU matmuls with f32 accumulation; all dims lane/sublane aligned.
        h = jnp.dot(x.astype(w_dtype), w1, preferred_element_type=jnp.float32)
        h = jax.nn.sigmoid(h + b1_ref[...])
        y = jnp.dot(h.astype(w_dtype), w2, preferred_element_type=jnp.float32)
        y = jax.nn.sigmoid(y + b2_ref[...])
        if needs_pad:
            y = y[:, :D]          # drop padded output lanes before the store
        o_ref[...] = (y * 5.0).astype(o_ref.dtype)

    return kernel


def aush_generator_forward(x, w1, b1, w2, b2, *, block_b=None,
                           use_bf16_weights=True, out_dtype=None):
    """x: [B, D].  Returns [B, D] == sigmoid(sigmoid(x@W1+b1)@W2+b2) * 5.

    W1: [D, H], W2: [H, D] (transposed vs torch's [out, in]).
    use_bf16_weights=True runs the matmuls (weights AND activations feeding the
    MXU) in bf16 with f32 accumulation: abs error ~1e-1 on the [0, 5] output
    range.  Pass False for full f32 precision.
    """
    B, D = x.shape
    Din, H = w1.shape
    assert Din == D and w2.shape == (H, D), "weights must be [D,H] and [H,D]"
    out_dtype = out_dtype or x.dtype

    # Lane padding for the (tiny, VMEM-resident) weights only.
    D_pad = _round_up(D, 128)
    H_pad = _round_up(H, 128)
    needs_pad = D_pad != D

    w_dtype = jnp.bfloat16 if use_bf16_weights else jnp.float32
    w_isize = jnp.dtype(w_dtype).itemsize
    x_isize = jnp.dtype(x.dtype).itemsize
    o_isize = jnp.dtype(out_dtype).itemsize

    # --- VMEM budget -> batch tile size --------------------------------------
    vmem_cap = _vmem_capacity_bytes()
    resident = 2 * D_pad * H_pad * w_isize + (H_pad + D_pad) * 4   # W1+W2+b1+b2
    per_row = (2 * D_pad * x_isize            # double-buffered x tile
               + 2 * D_pad * o_isize          # double-buffered out tile
               + (D_pad * x_isize if needs_pad else 0)   # x re-pack scratch
               + 4 * (H_pad + D_pad))         # f32 intermediates h, y
    auto_block = block_b is None
    if auto_block:
        budget = max(int(vmem_cap * 0.7) - resident, 8 * per_row)
        block_b = min(512, budget // per_row)
    block_b = max(8, (int(block_b) // 8) * 8)
    block_b = min(block_b, _round_up(B, 8))
    # Give v7x's second TensorCore work: force >= 2 grid steps on real batches.
    if auto_block and B >= 32 and pl.cdiv(B, block_b) == 1:
        block_b = _round_up(pl.cdiv(B, 2), 8)
    grid = (pl.cdiv(B, block_b),)

    vmem_needed = resident + per_row * block_b + 2 * 1024 * 1024
    cp_kwargs = dict(dimension_semantics=("parallel",))
    limit_cap = max(vmem_cap - 4 * 1024 * 1024, 16 * 1024 * 1024)
    if vmem_needed > 12 * 1024 * 1024:   # v5e default scoped limit is ~16 MiB
        cp_kwargs["vmem_limit_bytes"] = int(min(vmem_needed + 4 * 1024 * 1024,
                                                limit_cap))
    # TODO(synk): if the resident weights alone approach limit_cap (item counts
    # in the tens of thousands, esp. on v7x's 64 MiB VMEM), tile the output D
    # dimension on a second 'arbitrary' grid axis (block W2/b2, persistent h
    # scratch) instead of keeping both weight matrices fully resident.

    # Zero padding is exact: padded x columns hit zero W1 rows; padded hidden
    # units (sigmoid(0)=0.5) hit zero W2 rows; padded output lanes are dropped.
    w1p = _pad2(w1, (D_pad, H_pad), w_dtype)
    b1p = _pad2(b1.reshape(1, -1), (1, H_pad), jnp.float32)
    w2p = _pad2(w2, (H_pad, D_pad), w_dtype)
    b2p = _pad2(b2.reshape(1, -1), (1, D_pad), jnp.float32)

    cost = pl.CostEstimate(
        flops=4 * B * D * H,                       # two matmuls
        transcendentals=B * (H + D),               # sigmoids
        bytes_accessed=int(B * D * (x_isize + o_isize)
                           + 2 * D_pad * H_pad * w_isize
                           + (H_pad + D_pad) * 4),
    )

    scratch_shapes = ([pltpu.VMEM((block_b, D_pad), x.dtype)] if needs_pad else [])

    out = pl.pallas_call(
        _make_kernel(D, D_pad, w_dtype, needs_pad),
        out_shape=jax.ShapeDtypeStruct((B, D), out_dtype),
        grid_spec=pltpu.PrefetchScalarGridSpec(
            num_scalar_prefetch=0,
            grid=grid,
            in_specs=[
                pl.BlockSpec((block_b, D), lambda i: (i, 0)),        # x tile
                pl.BlockSpec(memory_space=pltpu.MemorySpace.VMEM),   # W1 resident
                pl.BlockSpec(memory_space=pltpu.MemorySpace.VMEM),   # b1
                pl.BlockSpec(memory_space=pltpu.MemorySpace.VMEM),   # W2 resident
                pl.BlockSpec(memory_space=pltpu.MemorySpace.VMEM),   # b2
            ],
            out_specs=pl.BlockSpec((block_b, D), lambda i: (i, 0)),
            scratch_shapes=scratch_shapes,
        ),
        compiler_params=pltpu.CompilerParams(**cp_kwargs),
        cost_estimate=cost,
    )(x, w1p, b1p, w2p, b2p)

    return out


def init_params(key, input_dim, hidden=128, dtype=jnp.float32):
    """Deterministic init mimicking torch nn.Linear defaults (uniform +/- 1/sqrt(fan_in))."""
    k1, k2, k3, k4 = jax.random.split(key, 4)
    bound1 = 1.0 / math.sqrt(input_dim)
    bound2 = 1.0 / math.sqrt(hidden)
    w1 = jax.random.uniform(k1, (input_dim, hidden), dtype, -bound1, bound1)
    b1 = jax.random.uniform(k2, (1, hidden), dtype, -bound1, bound1)
    w2 = jax.random.uniform(k3, (hidden, input_dim), dtype, -bound2, bound2)
    b2 = jax.random.uniform(k4, (1, input_dim), dtype, -bound2, bound2)
    return w1, b1, w2, b2


if __name__ == "__main__":
    key = jax.random.PRNGKey(0)
    kx1, kx2, kp = jax.random.split(key, 3)

    # Small, deliberately non-aligned shapes: B not a multiple of 8 and
    # D (= input_dim / item count) not a multiple of 128.
    D = 200
    w1, b1, w2, b2 = init_params(kp, D)

    def ref_fn(x):
        return jax.nn.sigmoid(jax.nn.sigmoid(x @ w1 + b1) @ w2 + b2) * 5.0

    # Case 1: tiny batch -> single (ragged) block.
    x1 = jax.random.uniform(kx1, (6, D), jnp.float32)
    # Case 2: larger ragged batch -> multi-step cdiv grid + megacore split path.
    x2 = jax.random.uniform(kx2, (70, D), jnp.float32)

    for x in (x1, x2):
        ref = ref_fn(x)
        out_f32 = jax.block_until_ready(
            aush_generator_forward(x, w1, b1, w2, b2, use_bf16_weights=False))
        out_bf16 = jax.block_until_ready(
            aush_generator_forward(x, w1, b1, w2, b2, use_bf16_weights=True))
        assert out_f32.shape == x.shape and out_bf16.shape == x.shape
        assert jnp.allclose(out_f32, ref, atol=1e-4, rtol=1e-4), \
            "f32 kernel mismatch vs reference"
        assert jnp.allclose(out_bf16, ref, atol=1.5e-1, rtol=5e-2), \
            "bf16 kernel mismatch vs reference"

    print("KERNEL_OK")
</pallas_src>

<mosaic_0001>
module attributes {stable_mosaic.version = 11 : i64} {
  func.func @kernel(%arg0: i32, %arg1: memref<8x200xf32, #tpu.memory_space<vmem>>, %arg2: memref<256x128xf32, #tpu.memory_space<vmem>>, %arg3: memref<1x128xf32, #tpu.memory_space<vmem>>, %arg4: memref<128x256xf32, #tpu.memory_space<vmem>>, %arg5: memref<1x256xf32, #tpu.memory_space<vmem>>, %arg6: memref<8x200xf32, #tpu.memory_space<vmem>>, %arg7: memref<8x256xf32, #tpu.memory_space<vmem>>) attributes {dimension_semantics = [#tpu.dimension_semantics<parallel>], iteration_bounds = array<i64: 1>, scalar_prefetch = 0 : i64, scratch_operands = 1 : i64, tpu.core_type = #tpu.core_type<tc>, window_params = [{transform_indices = @transform_0, window_bounds = array<i64: 8, 200>}, {pipeline_mode = #tpu.pipeline_mode<synchronous>, transform_indices = @transform_1, window_bounds = array<i64: 256, 128>}, {pipeline_mode = #tpu.pipeline_mode<synchronous>, transform_indices = @transform_2, window_bounds = array<i64: 1, 128>}, {pipeline_mode = #tpu.pipeline_mode<synchronous>, transform_indices = @transform_3, window_bounds = array<i64: 128, 256>}, {pipeline_mode = #tpu.pipeline_mode<synchronous>, transform_indices = @transform_4, window_bounds = array<i64: 1, 256>}, {transform_indices = @transform_5, window_bounds = array<i64: 8, 200>}]} {
    %c0 = arith.constant 0 : index
    %c0_0 = arith.constant 0 : index
    %0 = vector.load %arg2[%c0, %c0_0] : memref<256x128xf32, #tpu.memory_space<vmem>>, vector<256x128xf32>
    %c0_1 = arith.constant 0 : index
    %c0_2 = arith.constant 0 : index
    %1 = vector.load %arg4[%c0_1, %c0_2] : memref<128x256xf32, #tpu.memory_space<vmem>>, vector<128x256xf32>
    %cst = arith.constant 0.000000e+00 : f32
    %2 = vector.broadcast %cst : f32 to vector<8x128xf32>
    %c0_3 = arith.constant 0 : index
    %c128 = arith.constant 128 : index
    %3 = vector.load %arg7[%c0_3, %c128] : memref<8x256xf32, #tpu.memory_space<vmem>>, vector<8x128xf32>
    tpu.vector_store %arg7[%c0_3, %c128], %2 {strides = array<i32>} : memref<8x256xf32, #tpu.memory_space<vmem>>, vector<8x128xf32>,
    %c0_4 = arith.constant 0 : index
    %c0_5 = arith.constant 0 : index
    %4 = vector.load %arg1[%c0_4, %c0_5] : memref<8x200xf32, #tpu.memory_space<vmem>>, vector<8x200xf32>
    %c0_6 = arith.constant 0 : index
    %c0_7 = arith.constant 0 : index
    %5 = vector.load %arg7[%c0_6, %c0_7] : memref<8x256xf32, #tpu.memory_space<vmem>>, vector<8x200xf32>
    tpu.vector_store %arg7[%c0_6, %c0_7], %4 {strides = array<i32>} : memref<8x256xf32, #tpu.memory_space<vmem>>, vector<8x200xf32>,
    %c0_8 = arith.constant 0 : index
    %c0_9 = arith.constant 0 : index
    %6 = vector.load %arg7[%c0_8, %c0_9] : memref<8x256xf32, #tpu.memory_space<vmem>>, vector<8x256xf32>
    %cst_10 = arith.constant dense<0.000000e+00> : vector<8x128xf32>
    %7 = tpu.matmul %6, %0, %cst_10 {dimension_numbers = #tpu.dot_dimension_numbers<[1], [0], [0], [1], [0, 0, 1, 1], [], []>} : vector<8x256xf32>, vector<256x128xf32>, vector<8x128xf32> -> vector<8x128xf32>
    %c0_11 = arith.constant 0 : index
    %c0_12 = arith.constant 0 : index
    %8 = vector.load %arg3[%c0_11, %c0_12] : memref<1x128xf32, #tpu.memory_space<vmem>>, vector<1x128xf32>
    %9 = vector.broadcast %8 : vector<1x128xf32> to vector<8x128xf32>
    %10 = arith.addf %7, %9 : vector<8x128xf32>
    %11 = arith.negf %10 : vector<8x128xf32>
    %12 = math.exp %11 : vector<8x128xf32>
    %cst_13 = arith.constant 1.000000e+00 : f32
    %13 = vector.broadcast %cst_13 : f32 to vector<8x128xf32>
    %14 = arith.addf %13, %12 : vector<8x128xf32>
    %15 = arith.divf %13, %14 : vector<8x128xf32>
    %cst_14 = arith.constant dense<0.000000e+00> : vector<8x256xf32>
    %16 = tpu.matmul %15, %1, %cst_14 {dimension_numbers = #tpu.dot_dimension_numbers<[1], [0], [0], [1], [0, 0, 1, 1], [], []>} : vector<8x128xf32>, vector<128x256xf32>, vector<8x256xf32> -> vector<8x256xf32>
    %c0_15 = arith.constant 0 : index
    %c0_16 = arith.constant 0 : index
    %17 = vector.load %arg5[%c0_15, %c0_16] : memref<1x256xf32, #tpu.memory_space<vmem>>, vector<1x256xf32>
    %18 = vector.broadcast %17 : vector<1x256xf32> to vector<8x256xf32>
    %19 = arith.addf %16, %18 : vector<8x256xf32>
    %20 = arith.negf %19 : vector<8x256xf32>
    %21 = math.exp %20 : vector<8x256xf32>
    %cst_17 = arith.constant 1.000000e+00 : f32
    %22 = vector.broadcast %cst_17 : f32 to vector<8x256xf32>
    %23 = arith.addf %22, %21 : vector<8x256xf32>
    %24 = arith.divf %22, %23 : vector<8x256xf32>
    %25 = vector.extract_strided_slice %24 {offsets = [0, 0], sizes = [8, 200], strides = [1, 1]} : vector<8x256xf32> to vector<8x200xf32>
    %cst_18 = arith.constant 5.000000e+00 : f32
    %26 = vector.broadcast %cst_18 : f32 to vector<8x200xf32>
    %27 = arith.mulf %25, %26 : vector<8x200xf32>
    %c0_19 = arith.constant 0 : index
    %c0_20 = arith.constant 0 : index
    %28 = vector.load %arg6[%c0_19, %c0_20] : memref<8x200xf32, #tpu.memory_space<vmem>>, vector<8x200xf32>
    tpu.vector_store %arg6[%c0_19, %c0_20], %27 {strides = array<i32>} : memref<8x200xf32, #tpu.memory_space<vmem>>, vector<8x200xf32>,
    return
  }
  func.func @transform_0(%arg0: i32) -> (i32, i32) {
    %c0_i32 = arith.constant 0 : i32
    %c0_i32_0 = arith.constant 0 : i32
    return %arg0, %c0_i32 : i32, i32
  }
  func.func @transform_1(%arg0: i32) -> (i32, i32) {
    %c0_i32 = arith.constant 0 : i32
    %c0_i32_0 = arith.constant 0 : i32
    %c0_i32_1 = arith.constant 0 : i32
    return %c0_i32, %c0_i32_0 : i32, i32
  }
  func.func @transform_2(%arg0: i32) -> (i32, i32) {
    %c0_i32 = arith.constant 0 : i32
    %c0_i32_0 = arith.constant 0 : i32
    %c0_i32_1 = arith.constant 0 : i32
    return %c0_i32, %c0_i32_0 : i32, i32
  }
  func.func @transform_3(%arg0: i32) -> (i32, i32) {
    %c0_i32 = arith.constant 0 : i32
    %c0_i32_0 = arith.constant 0 : i32
    %c0_i32_1 = arith.constant 0 : i32
    return %c0_i32, %c0_i32_0 : i32, i32
  }
  func.func @transform_4(%arg0: i32) -> (i32, i32) {
    %c0_i32 = arith.constant 0 : i32
    %c0_i32_0 = arith.constant 0 : i32
    %c0_i32_1 = arith.constant 0 : i32
    return %c0_i32, %c0_i32_0 : i32, i32
  }
  func.func @transform_5(%arg0: i32) -> (i32, i32) {
    %c0_i32 = arith.constant 0 : i32
    %c0_i32_0 = arith.constant 0 : i32
    return %arg0, %c0_i32 : i32, i32
  }
}

</mosaic_0001>

<llo_original>
// kernel: tpu_custom_call.1
$region0: #{tpu_custom_call.1}
  #allocation0 [shape = 'u32[]', space=smem, size = 0x4, offset = 0x4, fixed_abs, tag = 'smem constant byte address 0x4 - core index']
  #allocation1 [shape = 'u32[72,128]{1,0:T(1,128)}', space=vmem, size = 0x9000, scoped, tag = 'internal scratch']
  #allocation2 [shape = 'f32[8,256]{1,0:T(8,128)}', space=vmem, size = 0x2000, scoped, tag = 'scratch operand']
  %s0 = inlined_call_operand.hbm [shape: f32[6,200], index: 0, kind: input, shape index: {}]
  %s1 = inlined_call_operand.hbm [shape: f32[256,128], index: 1, kind: input, shape index: {}]
  %s2 = inlined_call_operand.vmem [shape: f32[1,128], index: 2, kind: input, shape index: {}]
  %s3 = inlined_call_operand.hbm [shape: f32[128,256], index: 3, kind: input, shape index: {}]
  %s4 = inlined_call_operand.vmem [shape: f32[1,256], index: 4, kind: input, shape index: {}]
  %s5 = inlined_call_operand.hbm [shape: f32[6,200], index: 5, kind: output, shape index: {}]
  %s6 = sld [smem:[#allocation0]]
  $region42: #{tpu_custom_call.1} parent=0
    _
  %s8 = ssub.s32 1, %s6
  %s9 = scalar_select 0, %s8, %s6
  $region1: #{tpu_custom_call.1} parent=0
    #allocation3 [shape = 'u8[8192]{0}', space=vmem, size = 0x2000, scoped, tag = 'input window, operand 0, single buffered']
    #allocation4 [shape = 's32[1]{0}', space=sflag, size = 0x4, scoped, tag = 'scoped memory for tpu_custom_call.1']
    #allocation5 [shape = 's32[1]{0}', space=sflag, size = 0x4, scoped, tag = 'scoped memory for tpu_custom_call.1']
    #allocation6 [shape = 'u8[131072]{0}', space=vmem, size = 0x20000, scoped, tag = 'input window, operand 1, single buffered']
    #allocation7 [shape = 's32[1]{0}', space=sflag, size = 0x4, scoped, tag = 'scoped memory for tpu_custom_call.1']
    #allocation8 [shape = 'u8[131072]{0}', space=vmem, size = 0x20000, scoped, tag = 'input window, operand 3, single buffered']
    #allocation9 [shape = 'u8[8192]{0}', space=vmem, size = 0x2000, scoped, tag = 'output window, operand 0, single buffered']
    %10 = vsyncpa [#allocation4], 0
    %11 = vsyncpa [#allocation7], 0
    %12 = vsyncpa [#allocation5], 0
    // Predicated region
    $region2: #{tpu_custom_call.1} parent=1 // pred_check
      _
    $region3: #{tpu_custom_call.1} parent=1 // pred_check_branch
      %14 = sbr.rel (0) target = $region5
    $region4: #{tpu_custom_call.1} parent=1 // pred_region
      %16 = vsyncadd [#allocation4], 0
      %s18 = sshll.u32 %s0, 4
      %s19 = int_to_ptr.hbm [resolvable:$true] %s18
      %s20 = sshll.u32 [#allocation3], 4
      %s21 = int_to_ptr.vmem [resolvable:$true] %s20
      %23 = dma.hbm_to_vmem [thread:$0]  %s19, 256, %s21, [#allocation4]
    $region5: #{tpu_custom_call.1} parent=1 // pred_fallthru
      _
    // Predicated region
    $region6: #{tpu_custom_call.1} parent=1 // pred_check
      _
    $region7: #{tpu_custom_call.1} parent=1 // pred_check_branch
      %25 = sbr.rel (0) target = $region9
    $region8: #{tpu_custom_call.1} parent=1 // pred_region
      %27 = vsyncadd [#allocation7], 0
      %s28 = sshll.u32 %s1, 4
      %s29 = int_to_ptr.hbm [resolvable:$true] %s28
      %s30 = sshll.u32 [#allocation6], 4
      %s31 = int_to_ptr.vmem [resolvable:$true] %s30
      %36 = dma.hbm_to_vmem [thread:$0]  %s29, 4096, %s31, [#allocation7], 128, 128, 8
    $region9: #{tpu_custom_call.1} parent=1 // pred_fallthru
      _
    // Predicated region
    $region10: #{tpu_custom_call.1} parent=1 // pred_check
      _
    $region11: #{tpu_custom_call.1} parent=1 // pred_check_branch
      %38 = sbr.rel (0) target = $region13
    $region12: #{tpu_custom_call.1} parent=1 // pred_region
      _
    $region13: #{tpu_custom_call.1} parent=1 // pred_fallthru
      _
    // Predicated region
    $region14: #{tpu_custom_call.1} parent=1 // pred_check
      _
    $region15: #{tpu_custom_call.1} parent=1 // pred_check_branch
      %40 = sbr.rel (0) target = $region17
    $region16: #{tpu_custom_call.1} parent=1 // pred_region
      %42 = vsyncadd [#allocation7], 0
      %s43 = sshll.u32 %s3, 4
      %s44 = int_to_ptr.hbm [resolvable:$true] %s43
      %s45 = sshll.u32 [#allocation8], 4
      %s46 = int_to_ptr.vmem [resolvable:$true] %s45
      %51 = dma.hbm_to_vmem [thread:$0]  %s44, 4096, %s46, [#allocation7], 256, 256, 16
    $region17: #{tpu_custom_call.1} parent=1 // pred_fallthru
      _
    // Predicated region
    $region18: #{tpu_custom_call.1} parent=1 // pred_check
      _
    $region19: #{tpu_custom_call.1} parent=1 // pred_check_branch
      %53 = sbr.rel (0) target = $region21
    $region20: #{tpu_custom_call.1} parent=1 // pred_region
      _
    $region21: #{tpu_custom_call.1} parent=1 // pred_fallthru
      _
    // Predicated region
    $region22: #{tpu_custom_call.1} parent=1 // pred_check
      _
    $region23: #{tpu_custom_call.1} parent=1 // pred_check_branch
      %55 = sbr.rel (0) target = $region25
    $region24: #{tpu_custom_call.1} parent=1 // pred_region
      %57 = dma.done [#allocation4], 256
    $region25: #{tpu_custom_call.1} parent=1 // pred_fallthru
      _
    // Predicated region
    $region26: #{tpu_custom_call.1} parent=1 // pred_check
      _
    $region27: #{tpu_custom_call.1} parent=1 // pred_check_branch
      %59 = sbr.rel (0) target = $region29
    $region28: #{tpu_custom_call.1} parent=1 // pred_region
      %61 = dma.done [#allocation7], 4096
    $region29: #{tpu_custom_call.1} parent=1 // pred_fallthru
      _
    // Predicated region
    $region30: #{tpu_custom_call.1} parent=1 // pred_check
      _
    $region31: #{tpu_custom_call.1} parent=1 // pred_check_branch
      %63 = sbr.rel (0) target = $region33
    $region32: #{tpu_custom_call.1} parent=1 // pred_region
      %65 = dma.done [#allocation7], 4096
    $region33: #{tpu_custom_call.1} parent=1 // pred_fallthru
      _
    %v66 = vld [vmem:[#allocation6] sm:$0xff]
    %v67 = vld [vmem:[#allocation6 + $0x8] sm:$0xff]
    %v68 = vld [vmem:[#allocation6 + $0x10] sm:$0xff]
    %v69 = vld [vmem:[#allocation6 + $0x18] sm:$0xff]
    %v70 = vld [vmem:[#allocation6 + $0x20] sm:$0xff]
    %v71 = vld [vmem:[#allocation6 + $0x28] sm:$0xff]
    %v72 = vld [vmem:[#allocation6 + $0x30] sm:$0xff]
    %v73 = vld [vmem:[#allocation6 + $0x38] sm:$0xff]
    %v74 = vld [vmem:[#allocation6 + $0x40] sm:$0xff]
    %v75 = vld [vmem:[#allocation6 + $0x48] sm:$0xff]
    %v76 = vld [vmem:[#allocation6 + $0x50] sm:$0xff]
    %v77 = vld [vmem:[#allocation6 + $0x58] sm:$0xff]
    %v78 = vld [vmem:[#allocation6 + $0x60] sm:$0xff]
    %v79 = vld [vmem:[#allocation6 + $0x68] sm:$0xff]
    %v80 = vld [vmem:[#allocation6 + $0x70] sm:$0xff]
    %v81 = vld [vmem:[#allocation6 + $0x78] sm:$0xff]
    %v82 = vld [vmem:[#allocation6 + $0x80] sm:$0xff]
    %v83 = vld [vmem:[#allocation6 + $0x88] sm:$0xff]
    %v84 = vld [vmem:[#allocation6 + $0x90] sm:$0xff]
    %v85 = vld [vmem:[#allocation6 + $0x98] sm:$0xff]
    %v86 = vld [vmem:[#allocation6 + $0xa0] sm:$0xff]
    %v87 = vld [vmem:[#allocation6 + $0xa8] sm:$0xff]
    %v88 = vld [vmem:[#allocation6 + $0xb0] sm:$0xff]
    %v89 = vld [vmem:[#allocation6 + $0xb8] sm:$0xff]
    %v90 = vld [vmem:[#allocation6 + $0xc0] sm:$0xff]
    %v91 = vld [vmem:[#allocation6 + $0xc8] sm:$0xff]
    %v92 = vld [vmem:[#allocation6 + $0xd0] sm:$0xff]
    %v93 = vld [vmem:[#allocation6 + $0xd8] sm:$0xff]
    %v94 = vld [vmem:[#allocation6 + $0xe0] sm:$0xff]
    %v95 = vld [vmem:[#allocation6 + $0xe8] sm:$0xff]
    %v96 = vld [vmem:[#allocation6 + $0xf0] sm:$0xff]
    %v97 = vld [vmem:[#allocation6 + $0xf8] sm:$0xff]
    %v98 = vld [vmem:[#allocation8] sm:$0xff]
    %v99 = vld [vmem:[#allocation8 + $0x8] sm:$0xff]
    %v100 = vld [vmem:[#allocation8 + $0x10] sm:$0xff]
    %v101 = vld [vmem:[#allocation8 + $0x18] sm:$0xff]
    %v102 = vld [vmem:[#allocation8 + $0x20] sm:$0xff]
    %v103 = vld [vmem:[#allocation8 + $0x28] sm:$0xff]
    %v104 = vld [vmem:[#allocation8 + $0x30] sm:$0xff]
    %v105 = vld [vmem:[#allocation8 + $0x38] sm:$0xff]
    %v106 = vld [vmem:[#allocation8 + $0x40] sm:$0xff]
    %v107 = vld [vmem:[#allocation8 + $0x48] sm:$0xff]
    %v108 = vld [vmem:[#allocation8 + $0x50] sm:$0xff]
    %v109 = vld [vmem:[#allocation8 + $0x58] sm:$0xff]
    %v110 = vld [vmem:[#allocation8 + $0x60] sm:$0xff]
    %v111 = vld [vmem:[#allocation8 + $0x68] sm:$0xff]
    %v112 = vld [vmem:[#allocation8 + $0x70] sm:$0xff]
    %v113 = vld [vmem:[#allocation8 + $0x78] sm:$0xff]
    %v114 = vld [vmem:[#allocation8 + $0x80] sm:$0xff]
    %v115 = vld [vmem:[#allocation8 + $0x88] sm:$0xff]
    %v116 = vld [vmem:[#allocation8 + $0x90] sm:$0xff]
    %v117 = vld [vmem:[#allocation8 + $0x98] sm:$0xff]
    %v118 = vld [vmem:[#allocation8 + $0xa0] sm:$0xff]
    %v119 = vld [vmem:[#allocation8 + $0xa8] sm:$0xff]
    %v120 = vld [vmem:[#allocation8 + $0xb0] sm:$0xff]
    %v121 = vld [vmem:[#allocation8 + $0xb8] sm:$0xff]
    %v122 = vld [vmem:[#allocation8 + $0xc0] sm:$0xff]
    %v123 = vld [vmem:[#allocation8 + $0xc8] sm:$0xff]
    %v124 = vld [vmem:[#allocation8 + $0xd0] sm:$0xff]
    %v125 = vld [vmem:[#allocation8 + $0xd8] sm:$0xff]
    %v126 = vld [vmem:[#allocation8 + $0xe0] sm:$0xff]
    %v127 = vld [vmem:[#allocation8 + $0xe8] sm:$0xff]
    %v128 = vld [vmem:[#allocation8 + $0xf0] sm:$0xff]
    %v129 = vld [vmem:[#allocation8 + $0xf8] sm:$0xff]
    %130 = vst [vmem:[#allocation2 + $0x8] sm:$0xff] 0.0
    %v131 = vld [vmem:[#allocation3] sm:$0xff]
    %v132 = vld [vmem:[#allocation3 + $0x8] sm:$0xff]
    %133 = vst [vmem:[#allocation2] sm:$0xff] %v131
    %vm134 = vcmask 588800
    %135 = vst.msk [vmem:[#allocation2 + $0x8] sm:$0xff] %vm134, %v132
    %v136 = vld [vmem:[#allocation2] sm:$0xff]
    %v137 = vld [vmem:[#allocation2 + $0x8] sm:$0xff]
    %v138 = vld [vmem:[%s2] sm:$0x1]
    %v140 = vperm.slane %v138, 0
    %142 = vmatpush.msra.mxu0 %v81
    %143 = vmatpush.msra.mxu0 %v80
    %144 = vmatpush.msra.mxu0 %v79
    %145 = vmatpush.msra.mxu0 %v78
    %146 = vmatpush.msra.mxu0 %v77
    %147 = vmatpush.msra.mxu0 %v76
    %148 = vmatpush.msra.mxu0 %v75
    %149 = vmatpush.msra.mxu0 %v74
    %150 = vmatpush.msra.mxu0 %v73
    %151 = vmatpush.msra.mxu0 %v72
    %152 = vmatpush.msra.mxu0 %v71
    %153 = vmatpush.msra.mxu0 %v70
    %154 = vmatpush.msra.mxu0 %v69
    %155 = vmatpush.msra.mxu0 %v68
    %156 = vmatpush.msra.mxu0 %v67
    %157 = vmatpush.msra.mxu0 %v66
    %158 = vmatmul.f32.gmra.mxu0 %v136
    %v159 = vpop.f32.mrf.mxu0
    %v160 = vadd.f32 %v140, %v159
    %161 = vdwg.mxu0
    %162 = vmatpush.msra.mxu0 %v97
    %163 = vmatpush.msra.mxu0 %v96
    %164 = vmatpush.msra.mxu0 %v95
    %165 = vmatpush.msra.mxu0 %v94
    %166 = vmatpush.msra.mxu0 %v93
    %167 = vmatpush.msra.mxu0 %v92
    %168 = vmatpush.msra.mxu0 %v91
    %169 = vmatpush.msra.mxu0 %v90
    %170 = vmatpush.msra.mxu0 %v89
    %171 = vmatpush.msra.mxu0 %v88
    %172 = vmatpush.msra.mxu0 %v87
    %173 = vmatpush.msra.mxu0 %v86
    %174 = vmatpush.msra.mxu0 %v85
    %175 = vmatpush.msra.mxu0 %v84
    %176 = vmatpush.msra.mxu0 %v83
    %177 = vmatpush.msra.mxu0 %v82
    %178 = vmatmul.f32.gmra.mxu0 %v137
    %v179 = vpop.f32.mrf.mxu0
    %v180 = vadd.f32 %v160, %v179
    %181 = vdwg.mxu0
    %v182 = vxor.u32 %v180, 2147483648
    %v183 = vmul.f32 %v182, 1.442695
    %v184 = vpow.pop %v183
    %v185 = vadd.f32 %v184, 1.0
    %v186 = vrcp.pop %v185
    %v187 = vmul.f32 %v185, %v186
    %v188 = vsub.f32 1.0, %v187
    %v189 = vmul.f32 %v186, %v188
    %v190 = vadd.f32 %v186, %v189
    %vm191 = vweird.f32 %v185
    %vm192 = vweird.f32 %v186
    %vm193 = vmor %vm191, %vm192
    %v194 = vsel %vm193, %v186, %v190
    %v195 = vand.u32 2147483647, %v185
    %vm196 = vcmp.eq.f32.partialorder %v195, 8.507059e+37
    %v197 = vand.u32 %v185, 2147483648
    %v198 = vor.u32 1.1754944e-38, %v197
    %v199 = vsel %vm196, %v198, %v194
    %v200 = vmul.f32 1.0, %v199
    %v201 = vld [vmem:[%s4] sm:$0x3]
    %v203 = vperm.slane %v201, 0
    %v204 = vperm.slane %v201, 1
    %207 = vmatpush.msra.mxu0 %v128
    %208 = vmatpush.msra.mxu0 %v126
    %209 = vmatpush.msra.mxu0 %v124
    %210 = vmatpush.msra.mxu0 %v122
    %211 = vmatpush.msra.mxu0 %v120
    %212 = vmatpush.msra.mxu0 %v118
    %213 = vmatpush.msra.mxu0 %v116
    %214 = vmatpush.msra.mxu0 %v114
    %215 = vmatpush.msra.mxu0 %v112
    %216 = vmatpush.msra.mxu0 %v110
    %217 = vmatpush.msra.mxu0 %v108
    %218 = vmatpush.msra.mxu0 %v106
    %219 = vmatpush.msra.mxu0 %v104
    %220 = vmatpush.msra.mxu0 %v102
    %221 = vmatpush.msra.mxu0 %v100
    %222 = vmatpush.msra.mxu0 %v98
    %223 = vmatmul.f32.gmra.mxu0 %v200
    %v224 = vpop.f32.mrf.mxu0
    %v225 = vadd.f32 %v203, %v224
    %226 = vdwg.mxu0
    %227 = vmatpush.msra.mxu0 %v129
    %228 = vmatpush.msra.mxu0 %v127
    %229 = vmatpush.msra.mxu0 %v125
    %230 = vmatpush.msra.mxu0 %v123
    %231 = vmatpush.msra.mxu0 %v121
    %232 = vmatpush.msra.mxu0 %v119
    %233 = vmatpush.msra.mxu0 %v117
    %234 = vmatpush.msra.mxu0 %v115
    %235 = vmatpush.msra.mxu0 %v113
    %236 = vmatpush.msra.mxu0 %v111
    %237 = vmatpush.msra.mxu0 %v109
    %238 = vmatpush.msra.mxu0 %v107
    %239 = vmatpush.msra.mxu0 %v105
    %240 = vmatpush.msra.mxu0 %v103
    %241 = vmatpush.msra.mxu0 %v101
    %242 = vmatpush.msra.mxu0 %v99
    %243 = vmatmul.f32.gmra.mxu0 %v200
    %v244 = vpop.f32.mrf.mxu0
    %v245 = vadd.f32 %v204, %v244
    %246 = vdwg.mxu0
    %v247 = vxor.u32 %v225, 2147483648
    %v248 = vxor.u32 %v245, 2147483648
    %v249 = vmul.f32 %v247, 1.442695
    %v250 = vpow.pop %v249
    %v251 = vmul.f32 %v248, 1.442695
    %v252 = vpow.pop %v251
    %v253 = vadd.f32 %v250, 1.0
    %v254 = vadd.f32 %v252, 1.0
    %v255 = vrcp.pop %v253
    %v256 = vmul.f32 %v253, %v255
    %v257 = vsub.f32 1.0, %v256
    %v258 = vmul.f32 %v255, %v257
    %v259 = vadd.f32 %v255, %v258
    %vm260 = vweird.f32 %v253
    %vm261 = vweird.f32 %v255
    %vm262 = vmor %vm260, %vm261
    %v263 = vsel %vm262, %v255, %v259
    %v264 = vand.u32 2147483647, %v253
    %vm265 = vcmp.eq.f32.partialorder %v264, 8.507059e+37
    %v266 = vand.u32 %v253, 2147483648
    %v267 = vor.u32 1.1754944e-38, %v266
    %v268 = vsel %vm265, %v267, %v263
    %v269 = vmul.f32 1.0, %v268
    %v270 = vrcp.pop %v254
    %v271 = vmul.f32 %v254, %v270
    %v272 = vsub.f32 1.0, %v271
    %v273 = vmul.f32 %v270, %v272
    %v274 = vadd.f32 %v270, %v273
    %vm275 = vweird.f32 %v254
    %vm276 = vweird.f32 %v270
    %vm277 = vmor %vm275, %vm276
    %v278 = vsel %vm277, %v270, %v274
    %v279 = vand.u32 2147483647, %v254
    %vm280 = vcmp.eq.f32.partialorder %v279, 8.507059e+37
    %v281 = vand.u32 %v254, 2147483648
    %v282 = vor.u32 1.1754944e-38, %v281
    %v283 = vsel %vm280, %v282, %v278
    %v284 = vmul.f32 1.0, %v283
    %v285 = vmul.f32 %v269, 5.0
    %v286 = vmul.f32 %v284, 5.0
    %287 = vst [vmem:[#allocation9] sm:$0xff] %v285
    %288 = vst.msk [vmem:[#allocation9 + $0x8] sm:$0xff] %vm134, %v286
    // Predicated region
    $region34: #{tpu_custom_call.1} parent=1 // pred_check
      _
    $region35: #{tpu_custom_call.1} parent=1 // pred_check_branch
      %290 = sbr.rel (0) target = $region37
    $region36: #{tpu_custom_call.1} parent=1 // pred_region
      %292 = vsyncadd [#allocation5], 0
      %s294 = sshll.u32 [#allocation9], 4
      %s295 = int_to_ptr.vmem [resolvable:$true] %s294
      %s296 = sshll.u32 %s5, 4
      %s297 = int_to_ptr.hbm [resolvable:$true] %s296
      %299 = dma.vmem_to_hbm [thread:$0]  %s295, 256, %s297, [#allocation5]
    $region37: #{tpu_custom_call.1} parent=1 // pred_fallthru
      _
    // Predicated region
    $region38: #{tpu_custom_call.1} parent=1 // pred_check
      _
    $region39: #{tpu_custom_call.1} parent=1 // pred_check_branch
      %301 = sbr.rel (0) target = $region41
    $region40: #{tpu_custom_call.1} parent=1 // pred_region
      %303 = dma.done [#allocation5], 256
    $region41: #{tpu_custom_call.1} parent=1 // pred_fallthru
      _
    %304 = vsyncpa [#allocation4], 1
    %305 = vsyncpa [#allocation7], 1
    %306 = vsyncpa [#allocation5], 1

</llo_original>
